<compile_context>
chip_gen: v7x
topology: tpu7x:2x2x1
jax: 0.10.0
libtpu: 0.0.40
codegen_flags: <defaults>
</compile_context>

<pallas_src>
import jax
import jax.numpy as jnp
from jax import lax
from jax.experimental import pallas as pl
from jax.experimental.pallas import tpu as pltpu


def _round_up(v, m):
    return ((v + m - 1) // m) * m


# Conservative per-kernel VMEM budget: leaves headroom inside v7x's 64 MiB
# physical VMEM and is far below v5e/v6e's 128 MiB.
_VMEM_BUDGET = 40 * 1024 * 1024


def _footprint_bytes(tm, tn, tk, in_bytes, out_bytes):
    """Double-buffered block footprint + f32 accumulator scratch."""
    return (2 * tm * tk * in_bytes        # x tiles (double-buffered)
            + 2 * tn * tk * in_bytes      # weight tiles (double-buffered)
            + 2 * tn * 4                  # bias tiles (f32)
            + 2 * tm * tn * out_bytes     # output tiles (double-buffered)
            + tm * tn * 4)                # f32 accumulator scratch


def _select_tiles(N, D, C, in_bytes, out_bytes,
                  *, budget=_VMEM_BUDGET, tm_cap=512, tk_cap=1024):
    """Pick (tm, tn, tk, Cp) so the footprint fits `budget`."""
    Cp = _round_up(C, 128)

    # --- K tile: largest multiple of 128 that divides D (no ragged block on
    #     the contraction axis -> no garbage accumulation); else whole D.
    if D <= tk_cap:
        tk = D
    else:
        tk = D
        t = (tk_cap // 128) * 128
        while t >= 128:
            if D % t == 0:
                tk = t
                break
            t -= 128

    # --- C tile: keep the whole (lane-padded) weight panel resident when it
    #     fits comfortably (DMA'd once, never re-streamed per row-block),
    #     otherwise tile C in lane-aligned chunks.
    if 2 * Cp * tk * in_bytes <= budget // 2:
        tn = Cp
    else:
        tn = 512
        while tn > 128 and 2 * tn * tk * in_bytes > budget // 2:
            tn //= 2

    # --- N tile: whole N when small (block == full dim is always legal),
    #     otherwise a multiple-of-8 cap; ragged last block handled by Pallas.
    tm = N if N <= tm_cap else tm_cap

    while _footprint_bytes(tm, tn, tk, in_bytes, out_bytes) > budget and tm > 8:
        tm = _round_up(max(8, tm // 2), 8)
    while _footprint_bytes(tm, tn, tk, in_bytes, out_bytes) > budget and tn > 128:
        tn = max(128, (tn // 2) // 128 * 128)

    return tm, tn, tk, Cp


def _linear_kernel(x_ref, w_ref, b_ref, y_ref, acc_ref):
    # x_ref: (tm, tk)  w_ref: (tn, tk)  b_ref: (1, tn)  y_ref: (tm, tn)
    k = pl.program_id(2)

    @pl.when(k == 0)
    def _():
        acc_ref[...] = jnp.zeros_like(acc_ref)

    # Contract over the shared D axis with the weight kept in PyTorch (C, D)
    # layout; the MXU handles this transposed-RHS contraction natively (same
    # pattern as the attention bqd,bkd->bqk einsum), no XLU transpose.
    acc_ref[...] += lax.dot_general(
        x_ref[...], w_ref[...],
        dimension_numbers=(((1,), (1,)), ((), ())),
        preferred_element_type=jnp.float32,
    )

    @pl.when(k == pl.num_programs(2) - 1)
    def _():
        y_ref[...] = (acc_ref[...] + b_ref[...]).astype(y_ref.dtype)


def feat_classifier_xy_forward(x, weight, bias, *, compute_dtype=None):
    """Pallas implementation of feat_classifier_xy.forward (type='linear').

    Args:
      x:      (N, D)  input features
      weight: (C, D)  PyTorch-convention nn.Linear weight
      bias:   (C,)    nn.Linear bias
      compute_dtype: optional narrower matmul dtype (e.g. jnp.bfloat16) for
        v6e/v7x MXU throughput; accumulation stays f32.
    Returns:
      (x, y) with y = x @ weight.T + bias, shape (N, C), dtype of x.
    """
    N, D = x.shape
    C = weight.shape[0]
    out_dtype = x.dtype

    if compute_dtype is not None and compute_dtype != x.dtype:
        x_c = x.astype(compute_dtype)
        w_c = weight.astype(compute_dtype)
    else:
        x_c, w_c = x, weight

    in_bytes = jnp.dtype(x_c.dtype).itemsize
    out_bytes = jnp.dtype(out_dtype).itemsize

    tm, tn, tk, Cp = _select_tiles(N, D, C, in_bytes, out_bytes)

    grid_m = pl.cdiv(N, tm)
    grid_n = pl.cdiv(Cp, tn)
    grid_k = pl.cdiv(D, tk)

    # v7x has 2 TensorCores: ensure >=2 blocks on a parallel axis when there
    # is enough work to split (neutral on single-core v5e/v6e).
    if grid_m == 1 and grid_n == 1 and N >= 16:
        tm = _round_up(pl.cdiv(N, 2), 8)
        grid_m = pl.cdiv(N, tm)

    # Only the (small) weight/bias are padded for lane-dense stores; x is NOT
    # padded -- the ragged last N-block is masked by Pallas.
    w_p = w_c if Cp == C else jnp.pad(w_c, ((0, Cp - C), (0, 0)))
    b_p = bias.astype(jnp.float32)
    if Cp != C:
        b_p = jnp.pad(b_p, (0, Cp - C))
    b2 = b_p.reshape(1, Cp)

    # Explicit scoped-VMEM limit derived from the real block footprint
    # (defaults are 16/32 MiB, well below what 512-tiles need at large D).
    fp = _footprint_bytes(tm, tn, tk, in_bytes, out_bytes)
    vmem_limit = min(max(int(fp * 1.25) + (2 << 20), 16 << 20), 56 << 20)

    # Advisory cost estimate, including x / weight re-streaming when tiled.
    x_passes = max(1, grid_n)
    w_passes = grid_m if (grid_n > 1 or grid_k > 1) else 1
    cost = pl.CostEstimate(
        flops=2 * N * D * Cp,
        transcendentals=0,
        bytes_accessed=(N * D * in_bytes * x_passes
                        + Cp * D * in_bytes * w_passes
                        + Cp * 4
                        + N * Cp * out_bytes),
    )

    y_p = pl.pallas_call(
        _linear_kernel,
        out_shape=jax.ShapeDtypeStruct((N, Cp), out_dtype),
        grid_spec=pltpu.PrefetchScalarGridSpec(
            num_scalar_prefetch=0,
            grid=(grid_m, grid_n, grid_k),
            in_specs=[
                pl.BlockSpec((tm, tk), lambda i, j, k: (i, k)),   # x tile
                pl.BlockSpec((tn, tk), lambda i, j, k: (j, k)),   # W tile (C,D)
                pl.BlockSpec((1, tn), lambda i, j, k: (0, j)),    # bias tile
            ],
            out_specs=pl.BlockSpec((tm, tn), lambda i, j, k: (i, j)),
            scratch_shapes=[pltpu.VMEM((tm, tn), jnp.float32)],
        ),
        compiler_params=pltpu.CompilerParams(
            dimension_semantics=("parallel", "parallel", "arbitrary"),
            vmem_limit_bytes=vmem_limit,
        ),
        cost_estimate=cost,
    )(x_c, w_p, b2)

    # Slice away the lane padding on C. (For large N/C a consumer could take
    # the padded (N, Cp) logits directly to skip this extra HBM pass.)
    y = y_p[:, :C]
    # forward returns the input unchanged alongside the logits
    return x, y


def init_params(key, class_num, bottleneck_dim):
    """Deterministic xavier-normal weight + zero bias (matches init_weights)."""
    fan_in, fan_out = bottleneck_dim, class_num
    std = (2.0 / (fan_in + fan_out)) ** 0.5
    weight = std * jax.random.normal(key, (class_num, bottleneck_dim),
                                     dtype=jnp.float32)
    bias = jnp.zeros((class_num,), dtype=jnp.float32)
    return weight, bias


if __name__ == "__main__":
    key = jax.random.PRNGKey(0)
    k_x, k_w = jax.random.split(key)

    batch = 8
    bottleneck_dim = 32
    class_num = 10

    x = jax.random.normal(k_x, (batch, bottleneck_dim), dtype=jnp.float32)
    weight, bias = init_params(k_w, class_num, bottleneck_dim)

    x_out, y_out = feat_classifier_xy_forward(x, weight, bias)
    jax.block_until_ready((x_out, y_out))

    # sanity check against plain JAX reference
    y_ref = x @ weight.T + bias
    assert x_out.shape == (batch, bottleneck_dim)
    assert y_out.shape == (batch, class_num)
    assert jnp.allclose(y_out, y_ref, atol=1e-5), "mismatch vs reference"
    assert jnp.array_equal(x_out, x), "x must pass through unchanged"

    print("KERNEL_OK")
</pallas_src>

<mosaic_0001>
module attributes {stable_mosaic.version = 11 : i64} {
  func.func @_linear_kernel(%arg0: i32, %arg1: i32, %arg2: i32, %arg3: memref<8x32xf32, #tpu.memory_space<vmem>>, %arg4: memref<128x32xf32, #tpu.memory_space<vmem>>, %arg5: memref<1x128xf32, #tpu.memory_space<vmem>>, %arg6: memref<8x128xf32, #tpu.memory_space<vmem>>, %arg7: memref<8x128xf32, #tpu.memory_space<vmem>>) attributes {dimension_semantics = [#tpu.dimension_semantics<parallel>, #tpu.dimension_semantics<parallel>, #tpu.dimension_semantics<arbitrary>], iteration_bounds = array<i64: 1, 1, 1>, scalar_prefetch = 0 : i64, scratch_operands = 1 : i64, tpu.core_type = #tpu.core_type<tc>, window_params = [{transform_indices = @transform_0, window_bounds = array<i64: 8, 32>}, {transform_indices = @transform_1, window_bounds = array<i64: 128, 32>}, {transform_indices = @transform_2, window_bounds = array<i64: 1, 128>}, {transform_indices = @transform_3, window_bounds = array<i64: 8, 128>}]} {
    %c0_i32 = arith.constant 0 : i32
    %0 = arith.cmpi eq, %arg2, %c0_i32 : i32
    %1 = arith.extui %0 : i1 to i32
    %c0_i32_0 = arith.constant 0 : i32
    %2 = arith.cmpi ne, %1, %c0_i32_0 : i32
    scf.if %2 {
      %cst_10 = arith.constant 0.000000e+00 : f32
      %12 = vector.broadcast %cst_10 : f32 to vector<8x128xf32>
      %c0_11 = arith.constant 0 : index
      %c0_12 = arith.constant 0 : index
      %13 = vector.load %arg7[%c0_11, %c0_12] : memref<8x128xf32, #tpu.memory_space<vmem>>, vector<8x128xf32>
      tpu.vector_store %arg7[%c0_11, %c0_12], %12 {strides = array<i32>} : memref<8x128xf32, #tpu.memory_space<vmem>>, vector<8x128xf32>,
    } else {
    }
    %c0 = arith.constant 0 : index
    %c0_1 = arith.constant 0 : index
    %3 = vector.load %arg7[%c0, %c0_1] : memref<8x128xf32, #tpu.memory_space<vmem>>, vector<8x128xf32>
    %c0_2 = arith.constant 0 : index
    %c0_3 = arith.constant 0 : index
    %4 = vector.load %arg3[%c0_2, %c0_3] : memref<8x32xf32, #tpu.memory_space<vmem>>, vector<8x32xf32>
    %c0_4 = arith.constant 0 : index
    %c0_5 = arith.constant 0 : index
    %5 = vector.load %arg4[%c0_4, %c0_5] : memref<128x32xf32, #tpu.memory_space<vmem>>, vector<128x32xf32>
    %cst = arith.constant dense<0.000000e+00> : vector<8x128xf32>
    %6 = tpu.matmul %4, %5, %cst {dimension_numbers = #tpu.dot_dimension_numbers<[1], [1], [0], [0], [0, 0, 1, 0], [], []>} : vector<8x32xf32>, vector<128x32xf32>, vector<8x128xf32> -> vector<8x128xf32>
    %7 = arith.addf %3, %6 : vector<8x128xf32>
    %c0_6 = arith.constant 0 : index
    %c0_7 = arith.constant 0 : index
    %8 = vector.load %arg7[%c0_6, %c0_7] : memref<8x128xf32, #tpu.memory_space<vmem>>, vector<8x128xf32>
    tpu.vector_store %arg7[%c0_6, %c0_7], %7 {strides = array<i32>} : memref<8x128xf32, #tpu.memory_space<vmem>>, vector<8x128xf32>,
    %c0_i32_8 = arith.constant 0 : i32
    %9 = arith.cmpi eq, %arg2, %c0_i32_8 : i32
    %10 = arith.extui %9 : i1 to i32
    %c0_i32_9 = arith.constant 0 : i32
    %11 = arith.cmpi ne, %10, %c0_i32_9 : i32
    scf.if %11 {
      %c0_10 = arith.constant 0 : index
      %c0_11 = arith.constant 0 : index
      %12 = vector.load %arg7[%c0_10, %c0_11] : memref<8x128xf32, #tpu.memory_space<vmem>>, vector<8x128xf32>
      %c0_12 = arith.constant 0 : index
      %c0_13 = arith.constant 0 : index
      %13 = vector.load %arg5[%c0_12, %c0_13] : memref<1x128xf32, #tpu.memory_space<vmem>>, vector<1x128xf32>
      %14 = vector.broadcast %13 : vector<1x128xf32> to vector<8x128xf32>
      %15 = arith.addf %12, %14 : vector<8x128xf32>
      %c0_14 = arith.constant 0 : index
      %c0_15 = arith.constant 0 : index
      %16 = vector.load %arg6[%c0_14, %c0_15] : memref<8x128xf32, #tpu.memory_space<vmem>>, vector<8x128xf32>
      tpu.vector_store %arg6[%c0_14, %c0_15], %15 {strides = array<i32>} : memref<8x128xf32, #tpu.memory_space<vmem>>, vector<8x128xf32>,
    } else {
    }
    return
  }
  func.func @transform_0(%arg0: i32, %arg1: i32, %arg2: i32) -> (i32, i32) {
    %c0_i32 = arith.constant 0 : i32
    return %arg0, %arg2 : i32, i32
  }
  func.func @transform_1(%arg0: i32, %arg1: i32, %arg2: i32) -> (i32, i32) {
    %c0_i32 = arith.constant 0 : i32
    return %arg1, %arg2 : i32, i32
  }
  func.func @transform_2(%arg0: i32, %arg1: i32, %arg2: i32) -> (i32, i32) {
    %c0_i32 = arith.constant 0 : i32
    %c0_i32_0 = arith.constant 0 : i32
    return %c0_i32, %arg1 : i32, i32
  }
  func.func @transform_3(%arg0: i32, %arg1: i32, %arg2: i32) -> (i32, i32) {
    %c0_i32 = arith.constant 0 : i32
    return %arg0, %arg1 : i32, i32
  }
}

</mosaic_0001>

<llo_original>
// kernel: tpu_custom_call.1
$region0: #{tpu_custom_call.1}
  #allocation0 [shape = 'u32[]', space=smem, size = 0x4, offset = 0x4, fixed_abs, tag = 'smem constant byte address 0x4 - core index']
  #allocation1 [shape = 'u32[144,128]{1,0:T(1,128)}', space=vmem, size = 0x12000, scoped, tag = 'internal scratch']
  #allocation2 [shape = 'f32[8,128]{1,0:T(8,128)}', space=vmem, size = 0x1000, scoped, tag = 'scratch operand']
  %s0 = inlined_call_operand.vmem [shape: f32[8,32], index: 0, kind: input, shape index: {}]
  %s1 = inlined_call_operand.vmem [shape: f32[128,32], index: 1, kind: input, shape index: {}]
  %s2 = inlined_call_operand.vmem [shape: f32[1,128], index: 2, kind: input, shape index: {}]
  %s3 = inlined_call_operand.hbm [shape: f32[8,128], index: 3, kind: output, shape index: {}]
  %s4 = sld [smem:[#allocation0]]
  $region30: #{tpu_custom_call.1} parent=0
    _
  %s6 = ssub.s32 1, %s4
  %s7 = scalar_select 0, %s6, %s4
  $region1: #{tpu_custom_call.1} parent=0
    #allocation3 [shape = 'u8[4096]{0}', space=vmem, size = 0x1000, scoped, tag = 'output window, operand 0, single buffered']
    #allocation4 [shape = 's32[1]{0}', space=sflag, size = 0x4, scoped, tag = 'scoped memory for tpu_custom_call.1']
    %8 = vsyncpa [#allocation4], 0
    // Predicated region
    $region2: #{tpu_custom_call.1} parent=1 // pred_check
      _
    $region3: #{tpu_custom_call.1} parent=1 // pred_check_branch
      %10 = sbr.rel (0) target = $region5
    $region4: #{tpu_custom_call.1} parent=1 // pred_region
      _
    $region5: #{tpu_custom_call.1} parent=1 // pred_fallthru
      _
    // Predicated region
    $region6: #{tpu_custom_call.1} parent=1 // pred_check
      _
    $region7: #{tpu_custom_call.1} parent=1 // pred_check_branch
      %12 = sbr.rel (0) target = $region9
    $region8: #{tpu_custom_call.1} parent=1 // pred_region
      _
    $region9: #{tpu_custom_call.1} parent=1 // pred_fallthru
      _
    // Predicated region
    $region10: #{tpu_custom_call.1} parent=1 // pred_check
      _
    $region11: #{tpu_custom_call.1} parent=1 // pred_check_branch
      %14 = sbr.rel (0) target = $region13
    $region12: #{tpu_custom_call.1} parent=1 // pred_region
      _
    $region13: #{tpu_custom_call.1} parent=1 // pred_fallthru
      _
    %p15 = scmp.eq.s32.totalorder 0, 0
    // Predicated region
    $region14: #{tpu_custom_call.1} parent=1 // pred_check
      %p16 = pneg %p15
    $region15: #{tpu_custom_call.1} parent=1 // pred_check_branch
      %18 = sbr.rel (%p16) target = $region17
    $region16: #{tpu_custom_call.1} parent=1 // pred_region
      %19 = vst [vmem:[#allocation2] sm:$0xff] 0.0
    $region17: #{tpu_custom_call.1} parent=1 // pred_fallthru
      _
    %v20 = vld [vmem:[#allocation2] sm:$0xff]
    %v21 = vld [vmem:[%s0] sm:$0xff]
    %v22 = vld [vmem:[%s1] sm:$0xff]
    %v23 = vld [vmem:[%s1 + $0x8] sm:$0xff]
    %v24 = vld [vmem:[%s1 + $0x10] sm:$0xff]
    %v25 = vld [vmem:[%s1 + $0x18] sm:$0xff]
    %v26 = vld [vmem:[%s1 + $0x20] sm:$0xff]
    %v27 = vld [vmem:[%s1 + $0x28] sm:$0xff]
    %v28 = vld [vmem:[%s1 + $0x30] sm:$0xff]
    %v29 = vld [vmem:[%s1 + $0x38] sm:$0xff]
    %v30 = vld [vmem:[%s1 + $0x40] sm:$0xff]
    %v31 = vld [vmem:[%s1 + $0x48] sm:$0xff]
    %v32 = vld [vmem:[%s1 + $0x50] sm:$0xff]
    %v33 = vld [vmem:[%s1 + $0x58] sm:$0xff]
    %v34 = vld [vmem:[%s1 + $0x60] sm:$0xff]
    %v35 = vld [vmem:[%s1 + $0x68] sm:$0xff]
    %v36 = vld [vmem:[%s1 + $0x70] sm:$0xff]
    %v37 = vld [vmem:[%s1 + $0x78] sm:$0xff]
    %vm38 = vcmask 261120
    %v40 = vsel %vm38, %v21, 0
    %v43 = vsel %vm38, %v22, 0
    %v46 = vsel %vm38, %v23, 0
    %v49 = vsel %vm38, %v24, 0
    %v52 = vsel %vm38, %v25, 0
    %v55 = vsel %vm38, %v26, 0
    %v58 = vsel %vm38, %v27, 0
    %v61 = vsel %vm38, %v28, 0
    %v64 = vsel %vm38, %v29, 0
    %v67 = vsel %vm38, %v30, 0
    %v70 = vsel %vm38, %v31, 0
    %v73 = vsel %vm38, %v32, 0
    %v76 = vsel %vm38, %v33, 0
    %v79 = vsel %vm38, %v34, 0
    %v82 = vsel %vm38, %v35, 0
    %v85 = vsel %vm38, %v36, 0
    %v88 = vsel %vm38, %v37, 0
    %90 = vmatprep.subr.mxu0 0.0
    %91 = vmatpush1.xpose.msra.mxu0 %v43
    %92 = vmatprep.subr.mxu0 0.0
    %93 = vmatpush1.xpose.msra.mxu0 %v46
    %94 = vmatprep.subr.mxu0 0.0
    %95 = vmatpush1.xpose.msra.mxu0 %v49
    %96 = vmatprep.subr.mxu0 0.0
    %97 = vmatpush1.xpose.msra.mxu0 %v52
    %98 = vmatprep.subr.mxu0 0.0
    %99 = vmatpush1.xpose.msra.mxu0 %v55
    %100 = vmatprep.subr.mxu0 0.0
    %101 = vmatpush1.xpose.msra.mxu0 %v58
    %102 = vmatprep.subr.mxu0 0.0
    %103 = vmatpush1.xpose.msra.mxu0 %v61
    %104 = vmatprep.subr.mxu0 0.0
    %105 = vmatpush1.xpose.msra.mxu0 %v64
    %106 = vmatprep.subr.mxu0 0.0
    %107 = vmatpush1.xpose.msra.mxu0 %v67
    %108 = vmatprep.subr.mxu0 0.0
    %109 = vmatpush1.xpose.msra.mxu0 %v70
    %110 = vmatprep.subr.mxu0 0.0
    %111 = vmatpush1.xpose.msra.mxu0 %v73
    %112 = vmatprep.subr.mxu0 0.0
    %113 = vmatpush1.xpose.msra.mxu0 %v76
    %114 = vmatprep.subr.mxu0 0.0
    %115 = vmatpush1.xpose.msra.mxu0 %v79
    %116 = vmatprep.subr.mxu0 0.0
    %117 = vmatpush1.xpose.msra.mxu0 %v82
    %118 = vmatprep.subr.mxu0 0.0
    %119 = vmatpush1.xpose.msra.mxu0 %v85
    %120 = vmatprep.subr.mxu0 0.0
    %121 = vmatpush1.xpose.msra.mxu0 %v88
    %122 = vmatprep.subr.mxu0 0.0
    %123 = vmatpush1.xpose.msra.mxu0 0.0
    %124 = vmatprep.subr.mxu0 0.0
    %125 = vmatpush1.xpose.msra.mxu0 0.0
    %126 = vmatprep.subr.mxu0 0.0
    %127 = vmatpush1.xpose.msra.mxu0 0.0
    %128 = vmatprep.subr.mxu0 0.0
    %129 = vmatpush1.xpose.msra.mxu0 0.0
    %130 = vmatprep.subr.mxu0 0.0
    %131 = vmatpush1.xpose.msra.mxu0 0.0
    %132 = vmatprep.subr.mxu0 0.0
    %133 = vmatpush1.xpose.msra.mxu0 0.0
    %134 = vmatprep.subr.mxu0 0.0
    %135 = vmatpush1.xpose.msra.mxu0 0.0
    %136 = vmatprep.subr.mxu0 0.0
    %137 = vmatpush1.xpose.msra.mxu0 0.0
    %138 = vmatprep.subr.mxu0 0.0
    %139 = vmatpush1.xpose.msra.mxu0 0.0
    %140 = vmatprep.subr.mxu0 0.0
    %141 = vmatpush1.xpose.msra.mxu0 0.0
    %142 = vmatprep.subr.mxu0 0.0
    %143 = vmatpush1.xpose.msra.mxu0 0.0
    %144 = vmatprep.subr.mxu0 0.0
    %145 = vmatpush1.xpose.msra.mxu0 0.0
    %146 = vmatprep.subr.mxu0 0.0
    %147 = vmatpush1.xpose.msra.mxu0 0.0
    %148 = vmatprep.subr.mxu0 0.0
    %149 = vmatpush1.xpose.msra.mxu0 0.0
    %150 = vmatprep.subr.mxu0 0.0
    %151 = vmatpush1.xpose.msra.mxu0 0.0
    %152 = vmatprep.subr.mxu0 0.0
    %153 = vmatpush1.xpose.msra.mxu0 0.0
    %154 = vmatprep.mubr.f32.mxu0 0.0
    %155 = vmatmul.mubr.f32.gmra.mrb[0].mxu0 %v40
    %v156 = vpop.f32.mrb[0].mxu0
    %v157 = vadd.f32 0.0, %v156
    %v158 = vpop.f32.mrb[0].mxu0
    %159 = vdwg.mxu0
    %v160 = vadd.f32 %v20, %v157
    %161 = vst [vmem:[#allocation2] sm:$0xff] %v160
    // Predicated region
    $region18: #{tpu_custom_call.1} parent=1 // pred_check
      %p162 = pneg %p15
    $region19: #{tpu_custom_call.1} parent=1 // pred_check_branch
      %164 = sbr.rel (%p162) target = $region21
    $region20: #{tpu_custom_call.1} parent=1 // pred_region
      %v165 = vld [vmem:[#allocation2] sm:$0xff]
      %v166 = vld [vmem:[%s2] sm:$0x1]
      %v168 = vlaneseq
      %v169 = vshrl.u32 %v168, 7
      %v170 = vsub.s32 0, %v169
      %v171 = vrot.slane %v166, %v170
      %v173 = vadd.f32 %v165, %v171
      %174 = vst [vmem:[#allocation3] sm:$0xff] %v173
    $region21: #{tpu_custom_call.1} parent=1 // pred_fallthru
      _
    // Predicated region
    $region22: #{tpu_custom_call.1} parent=1 // pred_check
      _
    $region23: #{tpu_custom_call.1} parent=1 // pred_check_branch
      %176 = sbr.rel (0) target = $region25
    $region24: #{tpu_custom_call.1} parent=1 // pred_region
      %s178 = ssub.s32 128, 128
      %179 = vsyncadd [#allocation4], %s178
      %s181 = sshll.u32 [#allocation3], 4
      %s182 = int_to_ptr.vmem [resolvable:$true] %s181
      %184 = dma.vmem_to_hbm [thread:$0]  %s182, 128, %s3, [#allocation4]
    $region25: #{tpu_custom_call.1} parent=1 // pred_fallthru
      _
    // Predicated region
    $region26: #{tpu_custom_call.1} parent=1 // pred_check
      _
    $region27: #{tpu_custom_call.1} parent=1 // pred_check_branch
      %186 = sbr.rel (0) target = $region29
    $region28: #{tpu_custom_call.1} parent=1 // pred_region
      %187 = dma.done [#allocation4], 128
    $region29: #{tpu_custom_call.1} parent=1 // pred_fallthru
      _
    %188 = vsyncpa [#allocation4], 1

</llo_original>
